<compile_context>
chip_gen: v6e
topology: v6e:2x2x1
jax: 0.10.0
libtpu: 0.0.40
codegen_flags: <defaults>
</compile_context>

<pallas_src>
import functools

import jax
import jax.numpy as jnp
from jax.experimental import pallas as pl
from jax.experimental.pallas import tpu as pltpu


def _log_sigmoid(x):
    # x is clamped to [-10, 10]; exp(-x) <= e^10, so this is overflow-safe and
    # equals log(sigmoid(x)) with 2 EUP transcendentals instead of 3.
    return -jnp.log(1.0 + jnp.exp(-x))


def _sgns_kernel(u_ref, e_ref, out_ref, *, num_pos, batch_total, block_batch):
    t = pl.program_id(0)

    # Cast to f32 right after load (v5e has no bf16 VPU/EUP path; tables may be
    # stored bf16 in HBM to halve streamed bytes).
    u = u_ref[...].astype(jnp.float32)      # (BB, D)       center embeddings
    e = e_ref[...].astype(jnp.float32)      # (BB, K, D)    [pos | neg] rows

    # Scores on the VPU + XLU (broadcast multiply + lane reduction, no MXU).
    s = jnp.sum(e * u[:, None, :], axis=-1)                 # (BB, K)

    # Per-column sign: first `num_pos` columns are positives, rest negatives.
    col = jax.lax.broadcasted_iota(jnp.int32, s.shape, 1)
    s = jnp.where(col < num_pos, s, -s)

    s = jnp.clip(s, -10.0, 10.0)
    ls = _log_sigmoid(s)

    if batch_total % block_batch != 0:
        # Ragged tail: rows past B hold unspecified data (Pallas partial
        # block); clip bounded it above, and the mask discards it here.
        row = jax.lax.broadcasted_iota(jnp.int32, s.shape, 0)
        valid = (t * block_batch + row) < batch_total
        partial = jnp.sum(jnp.where(valid, ls, 0.0))
    else:
        partial = jnp.sum(ls)

    # Lane-dense partial-sum row (no single-lane masked store).
    out_ref[...] = jnp.full((1, 1, 128), partial, jnp.float32)


def _vmem_capacity_bytes():
    """Per-core VMEM capacity; conservative fallback if the query fails."""
    try:
        info = pltpu.get_tpu_info()
        cap = getattr(info, "vmem_capacity_bytes", None)
        if cap:
            return int(cap)
    except Exception:
        pass
    return 64 * 1024 * 1024  # v7x per-TensorCore VMEM (smallest of v5e/v6e/v7x)


def _vmem_limit_bytes():
    cap = _vmem_capacity_bytes()
    # ~54 MiB on v7x (64 MiB/TC), capped at 100 MiB on v5e/v6e (128 MiB).
    return max(32 * 1024 * 1024, min(int(cap * 0.85), 100 * 1024 * 1024))


def _pick_block_batch(B, K, D, item_e, item_u):
    """Batch-tile size: >= ~4 MiB payload per grid step, within the VMEM budget."""
    d_pad = -(-D // 128) * 128              # lane padding of the D axis
    k_pad = -(-K // 8) * 8                  # sublane padding of the K axis
    # Double-buffered padded VMEM footprint per batch element (fused stream + u row).
    bytes_per_elem = 2 * (k_pad * d_pad * item_e + d_pad * item_u)

    budget = int(_vmem_capacity_bytes() * 0.7)   # ~45 MiB/TC v7x, ~90 MiB v5e/v6e
    bb_cap = max(1, budget // bytes_per_elem)

    # Target >= ~4 MiB of actual HBM payload for the dominant stream per step so
    # the ~0.35 us per-step overhead is negligible on every generation.
    payload_per_elem = max(1, K * D * item_e)
    bb_target = -(-(4 * 1024 * 1024) // payload_per_elem)

    bb = int(min(bb_cap, bb_target, B))
    if bb >= 8:
        bb = (bb // 8) * 8                  # keep the sublane dim 8-aligned
    return max(1, bb)


def sgns_loss_pallas(emb_u, emb_all, context_size, *, block_batch=None):
    """loss = -(1/(B*C)) * sum over all positive+negative log-sigmoid scores."""
    B, K, D = emb_all.shape

    bb = (_pick_block_batch(B, K, D, emb_all.dtype.itemsize, emb_u.dtype.itemsize)
          if block_batch is None else block_batch)
    num_tiles = -(-B // bb)                 # partial last block handled in-kernel

    kernel = functools.partial(
        _sgns_kernel, num_pos=context_size, batch_total=B, block_batch=bb)

    partials = pl.pallas_call(
        kernel,
        out_shape=jax.ShapeDtypeStruct((num_tiles, 1, 128), jnp.float32),
        grid_spec=pltpu.PrefetchScalarGridSpec(
            num_scalar_prefetch=0,
            grid=(num_tiles,),
            in_specs=[
                pl.BlockSpec((bb, D), lambda t: (t, 0)),          # emb_u (2-D)
                pl.BlockSpec((bb, K, D), lambda t: (t, 0, 0)),    # fused pos|neg
            ],
            out_specs=pl.BlockSpec((1, 1, 128), lambda t: (t, 0, 0)),
        ),
        compiler_params=pltpu.CompilerParams(
            dimension_semantics=("parallel",),   # distinct out block per tile
            vmem_limit_bytes=_vmem_limit_bytes(),
        ),
    )(emb_u, emb_all)

    # Fold the /C (mean over context) and /B (mean over batch) into one scale.
    return -jnp.sum(partials[:, 0, 0]) / (B * context_size)


def sgns_forward(u_table, v_table, pos_u, pos_v, nwords):
    B, C = pos_v.shape
    # Embedding lookups stay in XLA, but as ONE concatenated gather (single
    # (B, K, D) tensor, no negation / astype / pad copies in the wrapper).
    emb_u = u_table[pos_u]                                   # (B, D)
    idx_all = jnp.concatenate([pos_v, nwords], axis=1)       # (B, C + C*n_negs)
    emb_all = v_table[idx_all]                               # (B, K, D)
    # TODO(synk): fuse this gather into the kernel via scalar-prefetched
    # indices + manual DMA from an HBM-resident v_table (removes a full HBM
    # write+read of the (B, K, D) tensor).
    return sgns_loss_pallas(emb_u, emb_all, C)


def sgns_reference(u_table, v_table, pos_u, pos_v, nwords, n_negs):
    B, C = pos_v.shape
    emb_u = u_table[pos_u]
    emb_v = v_table[pos_v]
    emb_neg = -v_table[nwords]
    o = jnp.clip(jnp.einsum('bcd,bd->bc', emb_v, emb_u), -10.0, 10.0)
    oloss = jnp.mean(jnp.log(jax.nn.sigmoid(o)), axis=1)
    n = jnp.clip(jnp.einsum('bkd,bd->bk', emb_neg, emb_u), -10.0, 10.0)
    n = jnp.log(jax.nn.sigmoid(n)).reshape(B, C, n_negs)
    nloss = jnp.mean(jnp.sum(n, axis=2), axis=1)
    return -jnp.mean(oloss + nloss)


if __name__ == "__main__":
    forward_jit = jax.jit(sgns_forward)

    def run_case(key, vocab_size, embedding_dim, batch_size, context_size, n_negs):
        k_u, k_v, k_pu, k_pv, k_w, k_neg = jax.random.split(key, 6)
        initrange = 1.0 / embedding_dim
        u_table = jax.random.uniform(
            k_u, (vocab_size, embedding_dim), jnp.float32, -initrange, initrange)
        # Module init sets v_embeddings to constant 0; use small deterministic
        # values instead so the kernel computes something non-trivial.
        v_table = jax.random.uniform(
            k_v, (vocab_size, embedding_dim), jnp.float32, -initrange, initrange)
        # padding_idx row zeroed (nn.Embedding padding_idx semantics)
        u_table = u_table.at[0].set(0.0)
        v_table = v_table.at[0].set(0.0)

        pos_u = jax.random.randint(k_pu, (batch_size,), 1, vocab_size)
        pos_v = jax.random.randint(k_pv, (batch_size, context_size), 1, vocab_size)

        # Negative sampling: torch.multinomial(weights, ..., replacement=True)
        weights = jax.random.uniform(k_w, (vocab_size,), jnp.float32, 0.1, 1.0)
        nwords = jax.random.categorical(
            k_neg, jnp.log(weights),
            shape=(batch_size, context_size * n_negs)).astype(jnp.int32)

        loss = jax.block_until_ready(
            forward_jit(u_table, v_table, pos_u, pos_v, nwords))
        ref = jax.block_until_ready(
            sgns_reference(u_table, v_table, pos_u, pos_v, nwords, n_negs))
        assert jnp.allclose(loss, ref, rtol=1e-4, atol=1e-5), (loss, ref)

    key = jax.random.PRNGKey(0)
    k1, k2 = jax.random.split(key)
    # Small shapes matching the module defaults.
    run_case(k1, vocab_size=50, embedding_dim=32, batch_size=4,
             context_size=4, n_negs=20)
    # Larger batch where B % block_batch != 0 exercises the in-kernel tail mask
    # (no wrapper-side padding anymore).
    run_case(k2, vocab_size=200, embedding_dim=32, batch_size=300,
             context_size=4, n_negs=20)

    print("KERNEL_OK")
</pallas_src>

<mosaic_0001>
module attributes {stable_mosaic.version = 11 : i64} {
  func.func @_sgns_kernel(%arg0: i32, %arg1: memref<4x32xf32, #tpu.memory_space<vmem>>, %arg2: memref<4x84x32xf32, #tpu.memory_space<vmem>>, %arg3: memref<1x1x128xf32, #tpu.memory_space<vmem>>) attributes {dimension_semantics = [#tpu.dimension_semantics<parallel>], iteration_bounds = array<i64: 1>, scalar_prefetch = 0 : i64, scratch_operands = 0 : i64, tpu.core_type = #tpu.core_type<tc>, window_params = [{transform_indices = @transform_0, window_bounds = array<i64: 4, 32>}, {transform_indices = @transform_1, window_bounds = array<i64: 4, 84, 32>}, {transform_indices = @transform_2, window_bounds = array<i64: 1, 1, 128>}]} {
    %c0 = arith.constant 0 : index
    %c0_0 = arith.constant 0 : index
    %0 = vector.load %arg1[%c0, %c0_0] : memref<4x32xf32, #tpu.memory_space<vmem>>, vector<4x32xf32>
    %c0_1 = arith.constant 0 : index
    %c0_2 = arith.constant 0 : index
    %c0_3 = arith.constant 0 : index
    %1 = vector.load %arg2[%c0_1, %c0_2, %c0_3] : memref<4x84x32xf32, #tpu.memory_space<vmem>>, vector<4x84x32xf32>
    %2 = vector.shape_cast %0 : vector<4x32xf32> to vector<4x1x32xf32>
    %3 = vector.broadcast %2 : vector<4x1x32xf32> to vector<4x84x32xf32>
    %4 = arith.mulf %1, %3 : vector<4x84x32xf32>
    %cst = arith.constant dense<0.000000e+00> : vector<4x84xf32>
    %5 = vector.multi_reduction <add>, %4, %cst [2] : vector<4x84x32xf32> to vector<4x84xf32>
    %6 = tpu.iota {dimensions = array<i32: 1>} : vector<4x84xi32>
    %c4_i32 = arith.constant 4 : i32
    %7 = vector.broadcast %c4_i32 : i32 to vector<4x84xi32>
    %8 = arith.cmpi slt, %6, %7 : vector<4x84xi32>
    %cst_4 = arith.constant 0.000000e+00 : f32
    %9 = vector.broadcast %cst_4 : f32 to vector<4x84xf32>
    %10 = arith.subf %9, %5 : vector<4x84xf32>
    %11 = arith.select %8, %5, %10 : vector<4x84xi1>, vector<4x84xf32>
    %cst_5 = arith.constant -1.000000e+01 : f32
    %cst_6 = arith.constant 1.000000e+01 : f32
    %12 = vector.broadcast %cst_5 : f32 to vector<4x84xf32>
    %13 = arith.maximumf %12, %11 : vector<4x84xf32>
    %14 = vector.broadcast %cst_6 : f32 to vector<4x84xf32>
    %15 = arith.minimumf %14, %13 : vector<4x84xf32>
    %cst_7 = arith.constant 0.000000e+00 : f32
    %16 = vector.broadcast %cst_7 : f32 to vector<4x84xf32>
    %17 = arith.subf %16, %15 : vector<4x84xf32>
    %18 = math.exp %17 : vector<4x84xf32>
    %cst_8 = arith.constant 1.000000e+00 : f32
    %19 = vector.broadcast %cst_8 : f32 to vector<4x84xf32>
    %20 = arith.addf %19, %18 : vector<4x84xf32>
    %21 = math.log %20 : vector<4x84xf32>
    %cst_9 = arith.constant 0.000000e+00 : f32
    %22 = vector.broadcast %cst_9 : f32 to vector<4x84xf32>
    %23 = arith.subf %22, %21 : vector<4x84xf32>
    %24 = vector.shape_cast %23 : vector<4x84xf32> to vector<1x4x84xf32>
    %cst_10 = arith.constant dense<0.000000e+00> : vector<1xf32>
    %25 = vector.multi_reduction <add>, %24, %cst_10 [1, 2] : vector<1x4x84xf32> to vector<1xf32>
    %26 = vector.shape_cast %25 : vector<1xf32> to vector<1x1x1xf32>
    %27 = vector.extract %26[0, 0, 0] : f32 from vector<1x1x1xf32>
    %28 = vector.broadcast %27 : f32 to vector<1x1x128xf32>
    %c0_11 = arith.constant 0 : index
    %c0_12 = arith.constant 0 : index
    %c0_13 = arith.constant 0 : index
    %29 = vector.load %arg3[%c0_11, %c0_12, %c0_13] : memref<1x1x128xf32, #tpu.memory_space<vmem>>, vector<1x1x128xf32>
    tpu.vector_store %arg3[%c0_11, %c0_12, %c0_13], %28 {strides = array<i32>} : memref<1x1x128xf32, #tpu.memory_space<vmem>>, vector<1x1x128xf32>,
    return
  }
  func.func @transform_0(%arg0: i32) -> (i32, i32) {
    %c0_i32 = arith.constant 0 : i32
    %c0_i32_0 = arith.constant 0 : i32
    return %arg0, %c0_i32 : i32, i32
  }
  func.func @transform_1(%arg0: i32) -> (i32, i32, i32) {
    %c0_i32 = arith.constant 0 : i32
    %c0_i32_0 = arith.constant 0 : i32
    %c0_i32_1 = arith.constant 0 : i32
    return %arg0, %c0_i32, %c0_i32_0 : i32, i32, i32
  }
  func.func @transform_2(%arg0: i32) -> (i32, i32, i32) {
    %c0_i32 = arith.constant 0 : i32
    %c0_i32_0 = arith.constant 0 : i32
    %c0_i32_1 = arith.constant 0 : i32
    return %arg0, %c0_i32, %c0_i32_0 : i32, i32, i32
  }
}

</mosaic_0001>

<llo_original>
// kernel: sgns_forward.1
$region0: #{sgns_forward.1}
  #allocation0 [shape = 'u32[]', space=smem, size = 0x4, offset = 0x4, fixed_abs, tag = 'smem constant byte address 0x4 - core index']
  #allocation1 [shape = 'u32[144,128]{1,0:T(1,128)}', space=vmem, size = 0x12000, scoped, tag = 'internal scratch']
  %s0 = inlined_call_operand.vmem [shape: f32[4,32], index: 0, kind: input, shape index: {}]
  %s1 = inlined_call_operand.vmem [shape: f32[4,84,32], index: 1, kind: input, shape index: {}]
  %s2 = inlined_call_operand.vmem [shape: f32[1,1,128], index: 2, kind: output, shape index: {}]
  %s3 = sld [smem:[#allocation0]]
  $region18: #{sgns_forward.1} parent=0
    _
  %s5 = ssub.s32 1, %s3
  %s6 = scalar_select 0, %s5, %s3
  // Predicated region
  $region2: #{sgns_forward.1} parent=0 // pred_check
    _
  $region3: #{sgns_forward.1} parent=0 // pred_check_branch
    %8 = sbr.rel (0) target = $region5
  $region4: #{sgns_forward.1} parent=0 // pred_region
    _
  $region5: #{sgns_forward.1} parent=0 // pred_fallthru
    _
  // Predicated region
  $region6: #{sgns_forward.1} parent=0 // pred_check
    _
  $region7: #{sgns_forward.1} parent=0 // pred_check_branch
    %10 = sbr.rel (0) target = $region9
  $region8: #{sgns_forward.1} parent=0 // pred_region
    _
  $region9: #{sgns_forward.1} parent=0 // pred_fallthru
    _
  %v11 = vld [vmem:[%s0] sm:$0xf]
  %v12 = vld [vmem:[%s1] sm:$0xff]
  %v13 = vld [vmem:[%s1 + $0x8] sm:$0xff]
  %v14 = vld [vmem:[%s1 + $0x10] sm:$0xff]
  %v15 = vld [vmem:[%s1 + $0x18] sm:$0xff]
  %v16 = vld [vmem:[%s1 + $0x20] sm:$0xff]
  %v17 = vld [vmem:[%s1 + $0x28] sm:$0xff]
  %v18 = vld [vmem:[%s1 + $0x30] sm:$0xff]
  %v19 = vld [vmem:[%s1 + $0x38] sm:$0xff]
  %v20 = vld [vmem:[%s1 + $0x40] sm:$0xff]
  %v21 = vld [vmem:[%s1 + $0x48] sm:$0xff]
  %v22 = vld [vmem:[%s1 + $0x50] sm:$0xf]
  %v23 = vld [vmem:[%s1 + $0x58] sm:$0xff]
  %v24 = vld [vmem:[%s1 + $0x60] sm:$0xff]
  %v25 = vld [vmem:[%s1 + $0x68] sm:$0xff]
  %v26 = vld [vmem:[%s1 + $0x70] sm:$0xff]
  %v27 = vld [vmem:[%s1 + $0x78] sm:$0xff]
  %v28 = vld [vmem:[%s1 + $0x80] sm:$0xff]
  %v29 = vld [vmem:[%s1 + $0x88] sm:$0xff]
  %v30 = vld [vmem:[%s1 + $0x90] sm:$0xff]
  %v31 = vld [vmem:[%s1 + $0x98] sm:$0xff]
  %v32 = vld [vmem:[%s1 + $0xa0] sm:$0xff]
  %v33 = vld [vmem:[%s1 + $0xa8] sm:$0xf]
  %v34 = vld [vmem:[%s1 + $0xb0] sm:$0xff]
  %v35 = vld [vmem:[%s1 + $0xb8] sm:$0xff]
  %v36 = vld [vmem:[%s1 + $0xc0] sm:$0xff]
  %v37 = vld [vmem:[%s1 + $0xc8] sm:$0xff]
  %v38 = vld [vmem:[%s1 + $0xd0] sm:$0xff]
  %v39 = vld [vmem:[%s1 + $0xd8] sm:$0xff]
  %v40 = vld [vmem:[%s1 + $0xe0] sm:$0xff]
  %v41 = vld [vmem:[%s1 + $0xe8] sm:$0xff]
  %v42 = vld [vmem:[%s1 + $0xf0] sm:$0xff]
  %v43 = vld [vmem:[%s1 + $0xf8] sm:$0xff]
  %v44 = vld [vmem:[%s1 + $0x100] sm:$0xf]
  %v45 = vld [vmem:[%s1 + $0x108] sm:$0xff]
  %v46 = vld [vmem:[%s1 + $0x110] sm:$0xff]
  %v47 = vld [vmem:[%s1 + $0x118] sm:$0xff]
  %v48 = vld [vmem:[%s1 + $0x120] sm:$0xff]
  %v49 = vld [vmem:[%s1 + $0x128] sm:$0xff]
  %v50 = vld [vmem:[%s1 + $0x130] sm:$0xff]
  %v51 = vld [vmem:[%s1 + $0x138] sm:$0xff]
  %v52 = vld [vmem:[%s1 + $0x140] sm:$0xff]
  %v53 = vld [vmem:[%s1 + $0x148] sm:$0xff]
  %v54 = vld [vmem:[%s1 + $0x150] sm:$0xff]
  %v55 = vld [vmem:[%s1 + $0x158] sm:$0xf]
  %v58 = vunpack.c.l.s4 1966171168
  %v59 = vunpack.c.0.s8 %v58
  %v60 = vlaneseq
  %v61 = vshrl.u32 %v60, 7
  %v62 = vsub.s32 %v59, %v61
  %v63 = vrot.slane %v11, %v62
  %v64 = vcombine.high %v63, %v63
  %v66 = vunpack.c.l.s4 1966171168
  %v67 = vunpack.c.0.s8 %v66
  %v68 = vlaneseq
  %v69 = vshrl.u32 %v68, 7
  %v70 = vsub.s32 %v67, %v69
  %v71 = vrot.slane %v63, %v70
  %v73 = vunpack.c.l.s4 1966171168
  %v74 = vunpack.c.0.s8 %v73
  %v75 = vlaneseq
  %v76 = vshrl.u32 %v75, 7
  %v77 = vsub.s32 %v74, %v76
  %v78 = vrot.slane %v64, %v77
  %v79 = vcombine.high %v71, %v71
  %v80 = vcombine.high %v78, %v78
  %v81 = vlaneseq
  %v82 = vshrl.u32 %v81, 7
  %v83 = vsub.s32 0, %v82
  %v84 = vrot.slane %v71, %v83
  %v85 = vlaneseq
  %v86 = vshrl.u32 %v85, 7
  %v87 = vsub.s32 0, %v86
  %v88 = vrot.slane %v78, %v87
  %v89 = vlaneseq
  %v90 = vshrl.u32 %v89, 7
  %v91 = vsub.s32 0, %v90
  %v92 = vrot.slane %v79, %v91
  %v93 = vlaneseq
  %v94 = vshrl.u32 %v93, 7
  %v95 = vsub.s32 0, %v94
  %v96 = vrot.slane %v80, %v95
  %v101 = vmul.f32 %v12, %v84
  %v102 = vmul.f32 %v13, %v84
  %v103 = vmul.f32 %v14, %v84
  %v104 = vmul.f32 %v15, %v84
  %v105 = vmul.f32 %v16, %v84
  %v106 = vmul.f32 %v17, %v84
  %v107 = vmul.f32 %v18, %v84
  %v108 = vmul.f32 %v19, %v84
  %v109 = vmul.f32 %v20, %v84
  %v110 = vmul.f32 %v21, %v84
  %v111 = vmul.f32 %v22, %v84
  %v112 = vmul.f32 %v23, %v88
  %v113 = vmul.f32 %v24, %v88
  %v114 = vmul.f32 %v25, %v88
  %v115 = vmul.f32 %v26, %v88
  %v116 = vmul.f32 %v27, %v88
  %v117 = vmul.f32 %v28, %v88
  %v118 = vmul.f32 %v29, %v88
  %v119 = vmul.f32 %v30, %v88
  %v120 = vmul.f32 %v31, %v88
  %v121 = vmul.f32 %v32, %v88
  %v122 = vmul.f32 %v33, %v88
  %v123 = vmul.f32 %v34, %v92
  %v124 = vmul.f32 %v35, %v92
  %v125 = vmul.f32 %v36, %v92
  %v126 = vmul.f32 %v37, %v92
  %v127 = vmul.f32 %v38, %v92
  %v128 = vmul.f32 %v39, %v92
  %v129 = vmul.f32 %v40, %v92
  %v130 = vmul.f32 %v41, %v92
  %v131 = vmul.f32 %v42, %v92
  %v132 = vmul.f32 %v43, %v92
  %v133 = vmul.f32 %v44, %v92
  %v134 = vmul.f32 %v45, %v96
  %v135 = vmul.f32 %v46, %v96
  %v136 = vmul.f32 %v47, %v96
  %v137 = vmul.f32 %v48, %v96
  %v138 = vmul.f32 %v49, %v96
  %v139 = vmul.f32 %v50, %v96
  %v140 = vmul.f32 %v51, %v96
  %v141 = vmul.f32 %v52, %v96
  %v142 = vmul.f32 %v53, %v96
  %v143 = vmul.f32 %v54, %v96
  %v144 = vmul.f32 %v55, %v96
  %vm145 = vcmask 261120
  %v146 = vsel %vm145, %v101, 0.0
  %147 = vadd.xlane.f32.xlu0 %v146
  %v148 = vpop.xlane.xlu0 %147
  %v149 = vsel %vm145, %v102, 0.0
  %150 = vadd.xlane.f32.xlu0 %v149
  %v151 = vpop.xlane.xlu0 %150
  %v152 = vsel %vm145, %v103, 0.0
  %153 = vadd.xlane.f32.xlu0 %v152
  %v154 = vpop.xlane.xlu0 %153
  %v155 = vsel %vm145, %v104, 0.0
  %156 = vadd.xlane.f32.xlu0 %v155
  %v157 = vpop.xlane.xlu0 %156
  %v158 = vsel %vm145, %v105, 0.0
  %159 = vadd.xlane.f32.xlu0 %v158
  %v160 = vpop.xlane.xlu0 %159
  %v161 = vsel %vm145, %v106, 0.0
  %162 = vadd.xlane.f32.xlu0 %v161
  %v163 = vpop.xlane.xlu0 %162
  %v164 = vsel %vm145, %v107, 0.0
  %165 = vadd.xlane.f32.xlu0 %v164
  %v166 = vpop.xlane.xlu0 %165
  %v167 = vsel %vm145, %v108, 0.0
  %168 = vadd.xlane.f32.xlu0 %v167
  %v169 = vpop.xlane.xlu0 %168
  %v170 = vsel %vm145, %v109, 0.0
  %171 = vadd.xlane.f32.xlu0 %v170
  %v172 = vpop.xlane.xlu0 %171
  %v173 = vsel %vm145, %v110, 0.0
  %174 = vadd.xlane.f32.xlu0 %v173
  %v175 = vpop.xlane.xlu0 %174
  %vm176 = vcmask 257024
  %v177 = vsel %vm176, %v111, 0.0
  %178 = vadd.xlane.f32.xlu0 %v177
  %v179 = vpop.xlane.xlu0 %178
  %v180 = vsel %vm145, %v112, 0.0
  %181 = vadd.xlane.f32.xlu0 %v180
  %v182 = vpop.xlane.xlu0 %181
  %v183 = vsel %vm145, %v113, 0.0
  %184 = vadd.xlane.f32.xlu0 %v183
  %v185 = vpop.xlane.xlu0 %184
  %v186 = vsel %vm145, %v114, 0.0
  %187 = vadd.xlane.f32.xlu0 %v186
  %v188 = vpop.xlane.xlu0 %187
  %v189 = vsel %vm145, %v115, 0.0
  %190 = vadd.xlane.f32.xlu0 %v189
  %v191 = vpop.xlane.xlu0 %190
  %v192 = vsel %vm145, %v116, 0.0
  %193 = vadd.xlane.f32.xlu0 %v192
  %v194 = vpop.xlane.xlu0 %193
  %v195 = vsel %vm145, %v117, 0.0
  %196 = vadd.xlane.f32.xlu0 %v195
  %v197 = vpop.xlane.xlu0 %196
  %v198 = vsel %vm145, %v118, 0.0
  %199 = vadd.xlane.f32.xlu0 %v198
  %v200 = vpop.xlane.xlu0 %199
  %v201 = vsel %vm145, %v119, 0.0
  %202 = vadd.xlane.f32.xlu0 %v201
  %v203 = vpop.xlane.xlu0 %202
  %v204 = vsel %vm145, %v120, 0.0
  %205 = vadd.xlane.f32.xlu0 %v204
  %v206 = vpop.xlane.xlu0 %205
  %v207 = vsel %vm145, %v121, 0.0
  %208 = vadd.xlane.f32.xlu0 %v207
  %v209 = vpop.xlane.xlu0 %208
  %v210 = vsel %vm176, %v122, 0.0
  %211 = vadd.xlane.f32.xlu0 %v210
  %v212 = vpop.xlane.xlu0 %211
  %v213 = vsel %vm145, %v123, 0.0
  %214 = vadd.xlane.f32.xlu0 %v213
  %v215 = vpop.xlane.xlu0 %214
  %v216 = vsel %vm145, %v124, 0.0
  %217 = vadd.xlane.f32.xlu0 %v216
  %v218 = vpop.xlane.xlu0 %217
  %v219 = vsel %vm145, %v125, 0.0
  %220 = vadd.xlane.f32.xlu0 %v219
  %v221 = vpop.xlane.xlu0 %220
  %v222 = vsel %vm145, %v126, 0.0
  %223 = vadd.xlane.f32.xlu0 %v222
  %v224 = vpop.xlane.xlu0 %223
  %v225 = vsel %vm145, %v127, 0.0
  %226 = vadd.xlane.f32.xlu0 %v225
  %v227 = vpop.xlane.xlu0 %226
  %v228 = vsel %vm145, %v128, 0.0
  %229 = vadd.xlane.f32.xlu0 %v228
  %v230 = vpop.xlane.xlu0 %229
  %v231 = vsel %vm145, %v129, 0.0
  %232 = vadd.xlane.f32.xlu0 %v231
  %v233 = vpop.xlane.xlu0 %232
  %v234 = vsel %vm145, %v130, 0.0
  %235 = vadd.xlane.f32.xlu0 %v234
  %v236 = vpop.xlane.xlu0 %235
  %v237 = vsel %vm145, %v131, 0.0
  %238 = vadd.xlane.f32.xlu0 %v237
  %v239 = vpop.xlane.xlu0 %238
  %v240 = vsel %vm145, %v132, 0.0
  %241 = vadd.xlane.f32.xlu0 %v240
  %v242 = vpop.xlane.xlu0 %241
  %v243 = vsel %vm176, %v133, 0.0
  %244 = vadd.xlane.f32.xlu0 %v243
  %v245 = vpop.xlane.xlu0 %244
  %v246 = vsel %vm145, %v134, 0.0
  %247 = vadd.xlane.f32.xlu0 %v246
  %v248 = vpop.xlane.xlu0 %247
  %v249 = vsel %vm145, %v135, 0.0
  %250 = vadd.xlane.f32.xlu0 %v249
  %v251 = vpop.xlane.xlu0 %250
  %v252 = vsel %vm145, %v136, 0.0
  %253 = vadd.xlane.f32.xlu0 %v252
  %v254 = vpop.xlane.xlu0 %253
  %v255 = vsel %vm145, %v137, 0.0
  %256 = vadd.xlane.f32.xlu0 %v255
  %v257 = vpop.xlane.xlu0 %256
  %v258 = vsel %vm145, %v138, 0.0
  %259 = vadd.xlane.f32.xlu0 %v258
  %v260 = vpop.xlane.xlu0 %259
  %v261 = vsel %vm145, %v139, 0.0
  %262 = vadd.xlane.f32.xlu0 %v261
  %v263 = vpop.xlane.xlu0 %262
  %v264 = vsel %vm145, %v140, 0.0
  %265 = vadd.xlane.f32.xlu0 %v264
  %v266 = vpop.xlane.xlu0 %265
  %v267 = vsel %vm145, %v141, 0.0
  %268 = vadd.xlane.f32.xlu0 %v267
  %v269 = vpop.xlane.xlu0 %268
  %v270 = vsel %vm145, %v142, 0.0
  %271 = vadd.xlane.f32.xlu0 %v270
  %v272 = vpop.xlane.xlu0 %271
  %v273 = vsel %vm145, %v143, 0.0
  %274 = vadd.xlane.f32.xlu0 %v273
  %v275 = vpop.xlane.xlu0 %274
  %v276 = vsel %vm176, %v144, 0.0
  %277 = vadd.xlane.f32.xlu0 %v276
  %v278 = vpop.xlane.xlu0 %277
  %v279 = vlaneseq
  %v280 = vand.u32 %v279, 127
  %vm281 = vcmp.lt.s32.totalorder %v280, 4
  %v282 = vsub.f32 0.0, %v148
  %v283 = vsub.f32 0.0, %v151
  %v284 = vsub.f32 0.0, %v154
  %v285 = vsub.f32 0.0, %v157
  %v286 = vsub.f32 0.0, %v160
  %v287 = vsub.f32 0.0, %v163
  %v288 = vsub.f32 0.0, %v166
  %v289 = vsub.f32 0.0, %v169
  %v290 = vsub.f32 0.0, %v172
  %v291 = vsub.f32 0.0, %v175
  %v292 = vsub.f32 0.0, %v179
  %v293 = vsub.f32 0.0, %v182
  %v294 = vsub.f32 0.0, %v185
  %v295 = vsub.f32 0.0, %v188
  %v296 = vsub.f32 0.0, %v191
  %v297 = vsub.f32 0.0, %v194
  %v298 = vsub.f32 0.0, %v197
  %v299 = vsub.f32 0.0, %v200
  %v300 = vsub.f32 0.0, %v203
  %v301 = vsub.f32 0.0, %v206
  %v302 = vsub.f32 0.0, %v209
  %v303 = vsub.f32 0.0, %v212
  %v304 = vsub.f32 0.0, %v215
  %v305 = vsub.f32 0.0, %v218
  %v306 = vsub.f32 0.0, %v221
  %v307 = vsub.f32 0.0, %v224
  %v308 = vsub.f32 0.0, %v227
  %v309 = vsub.f32 0.0, %v230
  %v310 = vsub.f32 0.0, %v233
  %v311 = vsub.f32 0.0, %v236
  %v312 = vsub.f32 0.0, %v239
  %v313 = vsub.f32 0.0, %v242
  %v314 = vsub.f32 0.0, %v245
  %v315 = vsub.f32 0.0, %v248
  %v316 = vsub.f32 0.0, %v251
  %v317 = vsub.f32 0.0, %v254
  %v318 = vsub.f32 0.0, %v257
  %v319 = vsub.f32 0.0, %v260
  %v320 = vsub.f32 0.0, %v263
  %v321 = vsub.f32 0.0, %v266
  %v322 = vsub.f32 0.0, %v269
  %v323 = vsub.f32 0.0, %v272
  %v324 = vsub.f32 0.0, %v275
  %v325 = vsub.f32 0.0, %v278
  %v370 = vlaneseq
  %v371 = vshrl.u32 %v370, 7
  %v372 = vsub.s32 %v280, %v371
  %v373 = vrot.slane %v148, %v372
  %v374 = vadd.s32 %v280, 4294967288
  %v375 = vlaneseq
  %v376 = vshrl.u32 %v375, 7
  %v377 = vsub.s32 %v374, %v376
  %v378 = vrot.slane %v151, %v377
  %vm379 = vcmask 130112
  %v380 = vsel %vm379, %v378, %v373
  %v381 = vadd.s32 %v280, 4294967280
  %v382 = vlaneseq
  %v383 = vshrl.u32 %v382, 7
  %v384 = vsub.s32 %v381, %v383
  %v385 = vrot.slane %v154, %v384
  %vm386 = vcmask 195712
  %v387 = vsel %vm386, %v385, %v380
  %v388 = vadd.s32 %v280, 4294967272
  %v389 = vlaneseq
  %v390 = vshrl.u32 %v389, 7
  %v391 = vsub.s32 %v388, %v390
  %v392 = vrot.slane %v157, %v391
  %vm393 = vcmask 261312
  %v394 = vsel %vm393, %v392, %v387
  %v395 = vadd.s32 %v280, 4294967264
  %v396 = vlaneseq
  %v397 = vshrl.u32 %v396, 7
  %v398 = vsub.s32 %v395, %v397
  %v399 = vrot.slane %v160, %v398
  %vm400 = vcmask 326912
  %v401 = vsel %vm400, %v399, %v394
  %v402 = vadd.s32 %v280, 4294967256
  %v403 = vlaneseq
  %v404 = vshrl.u32 %v403, 7
  %v405 = vsub.s32 %v402, %v404
  %v406 = vrot.slane %v163, %v405
  %vm407 = vcmask 392512
  %v408 = vsel %vm407, %v406, %v401
  %v409 = vadd.s32 %v280, 4294967248
  %v410 = vlaneseq
  %v411 = vshrl.u32 %v410, 7
  %v412 = vsub.s32 %v409, %v411
  %v413 = vrot.slane %v166, %v412
  %vm414 = vcmask 458112
  %v415 = vsel %vm414, %v413, %v408
  %v416 = vadd.s32 %v280, 4294967240
  %v417 = vlaneseq
  %v418 = vshrl.u32 %v417, 7
  %v419 = vsub.s32 %v416, %v418
  %v420 = vrot.slane %v169, %v419
  %vm421 = vcmask 523712
  %v422 = vsel %vm421, %v420, %v415
  %v423 = vadd.s32 %v280, 4294967232
  %v424 = vlaneseq
  %v425 = vshrl.u32 %v424, 7
  %v426 = vsub.s32 %v423, %v425
  %v427 = vrot.slane %v172, %v426
  %vm428 = vcmask 589312
  %v429 = vsel %vm428, %v427, %v422
  %v430 = vadd.s32 %v280, 4294967224
  %v431 = vlaneseq
  %v432 = vshrl.u32 %v431, 7
  %v433 = vsub.s32 %v430, %v432
  %v434 = vrot.slane %v175, %v433
  %vm435 = vcmask 654912
  %v436 = vsel %vm435, %v434, %v429
  %v437 = vadd.s32 %v280, 4294967216
  %v438 = vlaneseq
  %v439 = vshrl.u32 %v438, 7
  %v440 = vsub.s32 %v437, %v439
  %v441 = vrot.slane %v179, %v440
  %vm442 = vcmask 720512
  %v443 = vsel %vm442, %v441, %v436
  %v444 = vlaneseq
  %v445 = vshrl.u32 %v444, 7
  %v446 = vsub.s32 %v280, %v445
  %v447 = vrot.slane %v182, %v446
  %v448 = vlaneseq
  %v449 = vshrl.u32 %v448, 7
  %v450 = vsub.s32 %v374, %v449
  %v451 = vrot.slane %v185, %v450
  %v452 = vsel %vm379, %v451, %v447
  %v453 = vlaneseq
  %v454 = vshrl.u32 %v453, 7
  %v455 = vsub.s32 %v381, %v454
  %v456 = vrot.slane %v188, %v455
  %v457 = vsel %vm386, %v456, %v452
  %v458 = vlaneseq
  %v459 = vshrl.u32 %v458, 7
  %v460 = vsub.s32 %v388, %v459
  %v461 = vrot.slane %v191, %v460
  %v462 = vsel %vm393, %v461, %v457
  %v463 = vlaneseq
  %v464 = vshrl.u32 %v463, 7
  %v465 = vsub.s32 %v395, %v464
  %v466 = vrot.slane %v194, %v465
  %v467 = vsel %vm400, %v466, %v462
  %v468 = vlaneseq
  %v469 = vshrl.u32 %v468, 7
  %v470 = vsub.s32 %v402, %v469
  %v471 = vrot.slane %v197, %v470
  %v472 = vsel %vm407, %v471, %v467
  %v473 = vlaneseq
  %v474 = vshrl.u32 %v473, 7
  %v475 = vsub.s32 %v409, %v474
  %v476 = vrot.slane %v200, %v475
  %v477 = vsel %vm414, %v476, %v472
  %v478 = vlaneseq
  %v479 = vshrl.u32 %v478, 7
  %v480 = vsub.s32 %v416, %v479
  %v481 = vrot.slane %v203, %v480
  %v482 = vsel %vm421, %v481, %v477
  %v483 = vlaneseq
  %v484 = vshrl.u32 %v483, 7
  %v485 = vsub.s32 %v423, %v484
  %v486 = vrot.slane %v206, %v485
  %v487 = vsel %vm428, %v486, %v482
  %v488 = vlaneseq
  %v489 = vshrl.u32 %v488, 7
  %v490 = vsub.s32 %v430, %v489
  %v491 = vrot.slane %v209, %v490
  %v492 = vsel %vm435, %v491, %v487
  %v493 = vlaneseq
  %v494 = vshrl.u32 %v493, 7
  %v495 = vsub.s32 %v437, %v494
  %v496 = vrot.slane %v212, %v495
  %v497 = vsel %vm442, %v496, %v492
  %v498 = vlaneseq
  %v499 = vshrl.u32 %v498, 7
  %v500 = vsub.s32 %v280, %v499
  %v501 = vrot.slane %v215, %v500
  %v502 = vlaneseq
  %v503 = vshrl.u32 %v502, 7
  %v504 = vsub.s32 %v374, %v503
  %v505 = vrot.slane %v218, %v504
  %v506 = vsel %vm379, %v505, %v501
  %v507 = vlaneseq
  %v508 = vshrl.u32 %v507, 7
  %v509 = vsub.s32 %v381, %v508
  %v510 = vrot.slane %v221, %v509
  %v511 = vsel %vm386, %v510, %v506
  %v512 = vlaneseq
  %v513 = vshrl.u32 %v512, 7
  %v514 = vsub.s32 %v388, %v513
  %v515 = vrot.slane %v224, %v514
  %v516 = vsel %vm393, %v515, %v511
  %v517 = vlaneseq
  %v518 = vshrl.u32 %v517, 7
  %v519 = vsub.s32 %v395, %v518
  %v520 = vrot.slane %v227, %v519
  %v521 = vsel %vm400, %v520, %v516
  %v522 = vlaneseq
  %v523 = vshrl.u32 %v522, 7
  %v524 = vsub.s32 %v402, %v523
  %v525 = vrot.slane %v230, %v524
  %v526 = vsel %vm407, %v525, %v521
  %v527 = vlaneseq
  %v528 = vshrl.u32 %v527, 7
  %v529 = vsub.s32 %v409, %v528
  %v530 = vrot.slane %v233, %v529
  %v531 = vsel %vm414, %v530, %v526
  %v532 = vlaneseq
  %v533 = vshrl.u32 %v532, 7
  %v534 = vsub.s32 %v416, %v533
  %v535 = vrot.slane %v236, %v534
  %v536 = vsel %vm421, %v535, %v531
  %v537 = vlaneseq
  %v538 = vshrl.u32 %v537, 7
  %v539 = vsub.s32 %v423, %v538
  %v540 = vrot.slane %v239, %v539
  %v541 = vsel %vm428, %v540, %v536
  %v542 = vlaneseq
  %v543 = vshrl.u32 %v542, 7
  %v544 = vsub.s32 %v430, %v543
  %v545 = vrot.slane %v242, %v544
  %v546 = vsel %vm435, %v545, %v541
  %v547 = vlaneseq
  %v548 = vshrl.u32 %v547, 7
  %v549 = vsub.s32 %v437, %v548
  %v550 = vrot.slane %v245, %v549
  %v551 = vsel %vm442, %v550, %v546
  %v552 = vlaneseq
  %v553 = vshrl.u32 %v552, 7
  %v554 = vsub.s32 %v280, %v553
  %v555 = vrot.slane %v248, %v554
  %v556 = vlaneseq
  %v557 = vshrl.u32 %v556, 7
  %v558 = vsub.s32 %v374, %v557
  %v559 = vrot.slane %v251, %v558
  %v560 = vsel %vm379, %v559, %v555
  %v561 = vlaneseq
  %v562 = vshrl.u32 %v561, 7
  %v563 = vsub.s32 %v381, %v562
  %v564 = vrot.slane %v254, %v563
  %v565 = vsel %vm386, %v564, %v560
  %v566 = vlaneseq
  %v567 = vshrl.u32 %v566, 7
  %v568 = vsub.s32 %v388, %v567
  %v569 = vrot.slane %v257, %v568
  %v570 = vsel %vm393, %v569, %v565
  %v571 = vlaneseq
  %v572 = vshrl.u32 %v571, 7
  %v573 = vsub.s32 %v395, %v572
  %v574 = vrot.slane %v260, %v573
  %v575 = vsel %vm400, %v574, %v570
  %v576 = vlaneseq
  %v577 = vshrl.u32 %v576, 7
  %v578 = vsub.s32 %v402, %v577
  %v579 = vrot.slane %v263, %v578
  %v580 = vsel %vm407, %v579, %v575
  %v581 = vlaneseq
  %v582 = vshrl.u32 %v581, 7
  %v583 = vsub.s32 %v409, %v582
  %v584 = vrot.slane %v266, %v583
  %v585 = vsel %vm414, %v584, %v580
  %v586 = vlaneseq
  %v587 = vshrl.u32 %v586, 7
  %v588 = vsub.s32 %v416, %v587
  %v589 = vrot.slane %v269, %v588
  %v590 = vsel %vm421, %v589, %v585
  %v591 = vlaneseq
  %v592 = vshrl.u32 %v591, 7
  %v593 = vsub.s32 %v423, %v592
  %v594 = vrot.slane %v272, %v593
  %v595 = vsel %vm428, %v594, %v590
  %v596 = vlaneseq
  %v597 = vshrl.u32 %v596, 7
  %v598 = vsub.s32 %v430, %v597
  %v599 = vrot.slane %v275, %v598
  %v600 = vsel %vm435, %v599, %v595
  %v601 = vlaneseq
  %v602 = vshrl.u32 %v601, 7
  %v603 = vsub.s32 %v437, %v602
  %v604 = vrot.slane %v278, %v603
  %v605 = vsel %vm442, %v604, %v600
  %vm606 = vcmask 1041409
  %v607 = vsel %vm606, %v497, %v443
  %vm608 = vcmask 1042434
  %v609 = vsel %vm608, %v551, %v607
  %vm610 = vcmask 1043459
  %v611 = vsel %vm610, %v605, %v609
  %v657 = vlaneseq
  %v658 = vshrl.u32 %v657, 7
  %v659 = vsub.s32 %v280, %v658
  %v660 = vrot.slane %v282, %v659
  %v661 = vlaneseq
  %v662 = vshrl.u32 %v661, 7
  %v663 = vsub.s32 %v374, %v662
  %v664 = vrot.slane %v283, %v663
  %v665 = vsel %vm379, %v664, %v660
  %v666 = vlaneseq
  %v667 = vshrl.u32 %v666, 7
  %v668 = vsub.s32 %v381, %v667
  %v669 = vrot.slane %v284, %v668
  %v670 = vsel %vm386, %v669, %v665
  %v671 = vlaneseq
  %v672 = vshrl.u32 %v671, 7
  %v673 = vsub.s32 %v388, %v672
  %v674 = vrot.slane %v285, %v673
  %v675 = vsel %vm393, %v674, %v670
  %v676 = vlaneseq
  %v677 = vshrl.u32 %v676, 7
  %v678 = vsub.s32 %v395, %v677
  %v679 = vrot.slane %v286, %v678
  %v680 = vsel %vm400, %v679, %v675
  %v681 = vlaneseq
  %v682 = vshrl.u32 %v681, 7
  %v683 = vsub.s32 %v402, %v682
  %v684 = vrot.slane %v287, %v683
  %v685 = vsel %vm407, %v684, %v680
  %v686 = vlaneseq
  %v687 = vshrl.u32 %v686, 7
  %v688 = vsub.s32 %v409, %v687
  %v689 = vrot.slane %v288, %v688
  %v690 = vsel %vm414, %v689, %v685
  %v691 = vlaneseq
  %v692 = vshrl.u32 %v691, 7
  %v693 = vsub.s32 %v416, %v692
  %v694 = vrot.slane %v289, %v693
  %v695 = vsel %vm421, %v694, %v690
  %v696 = vlaneseq
  %v697 = vshrl.u32 %v696, 7
  %v698 = vsub.s32 %v423, %v697
  %v699 = vrot.slane %v290, %v698
  %v700 = vsel %vm428, %v699, %v695
  %v701 = vlaneseq
  %v702 = vshrl.u32 %v701, 7
  %v703 = vsub.s32 %v430, %v702
  %v704 = vrot.slane %v291, %v703
  %v705 = vsel %vm435, %v704, %v700
  %v706 = vlaneseq
  %v707 = vshrl.u32 %v706, 7
  %v708 = vsub.s32 %v437, %v707
  %v709 = vrot.slane %v292, %v708
  %v710 = vsel %vm442, %v709, %v705
  %v711 = vlaneseq
  %v712 = vshrl.u32 %v711, 7
  %v713 = vsub.s32 %v280, %v712
  %v714 = vrot.slane %v293, %v713
  %v715 = vlaneseq
  %v716 = vshrl.u32 %v715, 7
  %v717 = vsub.s32 %v374, %v716
  %v718 = vrot.slane %v294, %v717
  %v719 = vsel %vm379, %v718, %v714
  %v720 = vlaneseq
  %v721 = vshrl.u32 %v720, 7
  %v722 = vsub.s32 %v381, %v721
  %v723 = vrot.slane %v295, %v722
  %v724 = vsel %vm386, %v723, %v719
  %v725 = vlaneseq
  %v726 = vshrl.u32 %v725, 7
  %v727 = vsub.s32 %v388, %v726
  %v728 = vrot.slane %v296, %v727
  %v729 = vsel %vm393, %v728, %v724
  %v730 = vlaneseq
  %v731 = vshrl.u32 %v730, 7
  %v732 = vsub.s32 %v395, %v731
  %v733 = vrot.slane %v297, %v732
  %v734 = vsel %vm400, %v733, %v729
  %v735 = vlaneseq
  %v736 = vshrl.u32 %v735, 7
  %v737 = vsub.s32 %v402, %v736
  %v738 = vrot.slane %v298, %v737
  %v739 = vsel %vm407, %v738, %v734
  %v740 = vlaneseq
  %v741 = vshrl.u32 %v740, 7
  %v742 = vsub.s32 %v409, %v741
  %v743 = vrot.slane %v299, %v742
  %v744 = vsel %vm414, %v743, %v739
  %v745 = vlaneseq
  %v746 = vshrl.u32 %v745, 7
  %v747 = vsub.s32 %v416, %v746
  %v748 = vrot.slane %v300, %v747
  %v749 = vsel %vm421, %v748, %v744
  %v750 = vlaneseq
  %v751 = vshrl.u32 %v750, 7
  %v752 = vsub.s32 %v423, %v751
  %v753 = vrot.slane %v301, %v752
  %v754 = vsel %vm428, %v753, %v749
  %v755 = vlaneseq
  %v756 = vshrl.u32 %v755, 7
  %v757 = vsub.s32 %v430, %v756
  %v758 = vrot.slane %v302, %v757
  %v759 = vsel %vm435, %v758, %v754
  %v760 = vlaneseq
  %v761 = vshrl.u32 %v760, 7
  %v762 = vsub.s32 %v437, %v761
  %v763 = vrot.slane %v303, %v762
  %v764 = vsel %vm442, %v763, %v759
  %v765 = vlaneseq
  %v766 = vshrl.u32 %v765, 7
  %v767 = vsub.s32 %v280, %v766
  %v768 = vrot.slane %v304, %v767
  %v769 = vlaneseq
  %v770 = vshrl.u32 %v769, 7
  %v771 = vsub.s32 %v374, %v770
  %v772 = vrot.slane %v305, %v771
  %v773 = vsel %vm379, %v772, %v768
  %v774 = vlaneseq
  %v775 = vshrl.u32 %v774, 7
  %v776 = vsub.s32 %v381, %v775
  %v777 = vrot.slane %v306, %v776
  %v778 = vsel %vm386, %v777, %v773
  %v779 = vlaneseq
  %v780 = vshrl.u32 %v779, 7
  %v781 = vsub.s32 %v388, %v780
  %v782 = vrot.slane %v307, %v781
  %v783 = vsel %vm393, %v782, %v778
  %v784 = vlaneseq
  %v785 = vshrl.u32 %v784, 7
  %v786 = vsub.s32 %v395, %v785
  %v787 = vrot.slane %v308, %v786
  %v788 = vsel %vm400, %v787, %v783
  %v789 = vlaneseq
  %v790 = vshrl.u32 %v789, 7
  %v791 = vsub.s32 %v402, %v790
  %v792 = vrot.slane %v309, %v791
  %v793 = vsel %vm407, %v792, %v788
  %v794 = vlaneseq
  %v795 = vshrl.u32 %v794, 7
  %v796 = vsub.s32 %v409, %v795
  %v797 = vrot.slane %v310, %v796
  %v798 = vsel %vm414, %v797, %v793
  %v799 = vlaneseq
  %v800 = vshrl.u32 %v799, 7
  %v801 = vsub.s32 %v416, %v800
  %v802 = vrot.slane %v311, %v801
  %v803 = vsel %vm421, %v802, %v798
  %v804 = vlaneseq
  %v805 = vshrl.u32 %v804, 7
  %v806 = vsub.s32 %v423, %v805
  %v807 = vrot.slane %v312, %v806
  %v808 = vsel %vm428, %v807, %v803
  %v809 = vlaneseq
  %v810 = vshrl.u32 %v809, 7
  %v811 = vsub.s32 %v430, %v810
  %v812 = vrot.slane %v313, %v811
  %v813 = vsel %vm435, %v812, %v808
  %v814 = vlaneseq
  %v815 = vshrl.u32 %v814, 7
  %v816 = vsub.s32 %v437, %v815
  %v817 = vrot.slane %v314, %v816
  %v818 = vsel %vm442, %v817, %v813
  %v819 = vlaneseq
  %v820 = vshrl.u32 %v819, 7
  %v821 = vsub.s32 %v280, %v820
  %v822 = vrot.slane %v315, %v821
  %v823 = vlaneseq
  %v824 = vshrl.u32 %v823, 7
  %v825 = vsub.s32 %v374, %v824
  %v826 = vrot.slane %v316, %v825
  %v827 = vsel %vm379, %v826, %v822
  %v828 = vlaneseq
  %v829 = vshrl.u32 %v828, 7
  %v830 = vsub.s32 %v381, %v829
  %v831 = vrot.slane %v317, %v830
  %v832 = vsel %vm386, %v831, %v827
  %v833 = vlaneseq
  %v834 = vshrl.u32 %v833, 7
  %v835 = vsub.s32 %v388, %v834
  %v836 = vrot.slane %v318, %v835
  %v837 = vsel %vm393, %v836, %v832
  %v838 = vlaneseq
  %v839 = vshrl.u32 %v838, 7
  %v840 = vsub.s32 %v395, %v839
  %v841 = vrot.slane %v319, %v840
  %v842 = vsel %vm400, %v841, %v837
  %v843 = vlaneseq
  %v844 = vshrl.u32 %v843, 7
  %v845 = vsub.s32 %v402, %v844
  %v846 = vrot.slane %v320, %v845
  %v847 = vsel %vm407, %v846, %v842
  %v848 = vlaneseq
  %v849 = vshrl.u32 %v848, 7
  %v850 = vsub.s32 %v409, %v849
  %v851 = vrot.slane %v321, %v850
  %v852 = vsel %vm414, %v851, %v847
  %v853 = vlaneseq
  %v854 = vshrl.u32 %v853, 7
  %v855 = vsub.s32 %v416, %v854
  %v856 = vrot.slane %v322, %v855
  %v857 = vsel %vm421, %v856, %v852
  %v858 = vlaneseq
  %v859 = vshrl.u32 %v858, 7
  %v860 = vsub.s32 %v423, %v859
  %v861 = vrot.slane %v323, %v860
  %v862 = vsel %vm428, %v861, %v857
  %v863 = vlaneseq
  %v864 = vshrl.u32 %v863, 7
  %v865 = vsub.s32 %v430, %v864
  %v866 = vrot.slane %v324, %v865
  %v867 = vsel %vm435, %v866, %v862
  %v868 = vlaneseq
  %v869 = vshrl.u32 %v868, 7
  %v870 = vsub.s32 %v437, %v869
  %v871 = vrot.slane %v325, %v870
  %v872 = vsel %vm442, %v871, %v867
  %v873 = vsel %vm606, %v764, %v710
  %v874 = vsel %vm608, %v818, %v873
  %v875 = vsel %vm610, %v872, %v874
  %v877 = vsel %vm281, %v611, %v875
  %v878 = vmax.f32 %v877, -10.0
  %v879 = vmin.f32 %v878, 10.0
  %v880 = vsub.f32 0.0, %v879
  %v881 = vmul.f32 %v880, 1.442695
  %v882 = vpow.pop %v881
  %v883 = vadd.f32 %v882, 1.0
  %v884 = vlog2.pop %v883
  %v885 = vmul.f32 %v884, 0.6931472
  %v886 = vsub.f32 0.0, %v885
  %vm887 = vcmask 683008
  %v888 = vsel %vm887, %v886, 0.0
  %889 = vadd.xlane.f32.xlu0 %v888
  %v890 = vpop.xlane.xlu0 %889
  %v891 = vrot.slane %v890, 4
  %v892 = vadd.f32 %v890, %v891
  %v893 = vrot.slane %v892, 2
  %v894 = vadd.f32 %v892, %v893
  %v895 = vrot.slane %v894, 1
  %v896 = vadd.f32 %v894, %v895
  %s897 = vtos %v896
  %v898 = vstv %s897
  %899 = vst [vmem:[%s2] sm:$0x1] %v898
  // Predicated region
  $region10: #{sgns_forward.1} parent=0 // pred_check
    _
  $region11: #{sgns_forward.1} parent=0 // pred_check_branch
    %901 = sbr.rel (0) target = $region13
  $region12: #{sgns_forward.1} parent=0 // pred_region
    _
  $region13: #{sgns_forward.1} parent=0 // pred_fallthru
    _
  // Predicated region
  $region14: #{sgns_forward.1} parent=0 // pred_check
    _
  $region15: #{sgns_forward.1} parent=0 // pred_check_branch
    %903 = sbr.rel (0) target = $region17
  $region16: #{sgns_forward.1} parent=0 // pred_region
    _
  $region17: #{sgns_forward.1} parent=0 // pred_fallthru
    _

</llo_original>
